<compile_context>
chip_gen: v7x
topology: tpu7x:2x2x1
jax: 0.10.0
libtpu: 0.0.40
codegen_flags: <defaults>
</compile_context>

<pallas_src>
import functools

import jax
import jax.numpy as jnp
import numpy as np
from jax.experimental import pallas as pl
from jax.experimental.pallas import tpu as pltpu


_SUBLANE = 16        # lcm of f32 (8) / bf16 (16) sublane packing
_LANE = 128
_TM_CAP = 1024       # batch-tile cap; ~2-3 MiB of VMEM at this size


def _round_up(x, m):
    return ((x + m - 1) // m) * m


def _device_kind():
    try:
        return jax.devices()[0].device_kind.lower()
    except Exception:
        return ""


def _num_tensorcores_per_chip():
    # v7x exposes 2 TensorCores per chip; v5e/v6e have 1.
    return 2 if "v7" in _device_kind() else 1


def _default_act_dtype():
    # v6e/v7x VPU + EUP are bf16-native -> keep activations bf16 end to end.
    # v5e (and older) have no bf16 VPU/EUP path -> keep elementwise work f32.
    kind = _device_kind()
    if any(t in kind for t in ("v2", "v3", "v4", "v5")):
        return jnp.float32
    return jnp.bfloat16


def _choose_tm(n_rows, num_tc, cap=_TM_CAP):
    """Generation-aware batch-tile choice.

    Multi-TC chips (v7x): target >= 2 grid steps per TensorCore so each core's
    BlockSpec pipeline overlaps the x load / out store DMA with compute.
    Single-TC chips (v5e/v6e): take the biggest tile up to `cap`; splitting a
    batch that already fits is pure serialization with no megacore payoff.
    """
    n_rows = max(int(n_rows), 1)
    if num_tc >= 2 and n_rows <= num_tc * 2 * cap:
        tm = _round_up(pl.cdiv(n_rows, num_tc * 2), _SUBLANE)
        return max(_SUBLANE, min(cap, tm))
    return min(cap, _round_up(n_rows, _SUBLANE))


def _vade_kernel(x_ref, w_ref, b_ref, out_ref, *, dims, acts, act_dtype):
    """One batch tile through the whole MLP.

    x_ref  : (tm, Dp)     bf16 input tile (lane-dense, zero-padded features)
    w_ref  : (L, Si, So)  bf16 packed weight slab (one (Si, So) slot per layer)
    b_ref  : (L, So)      act-dtype packed bias slab
    out_ref: (tm, Dp)     reconstruction tile
    """
    h = x_ref[...]                                   # already bf16: no cast for layer 1
    for li, ((din, dout), act) in enumerate(zip(dims, acts)):
        w = w_ref[li, :din, :dout]                   # static sub-slice of the slab
        b = b_ref[li:li + 1, :dout]                  # (1, dout), broadcast over rows
        y = jnp.dot(h.astype(jnp.bfloat16), w,       # bf16 MXU operands, f32 acc
                    preferred_element_type=jnp.float32)
        y = y.astype(act_dtype) + b                  # bias / ReLU in act dtype
        if act == "relu":
            y = jax.nn.relu(y)
        elif act == "sigmoid":
            y = jax.nn.sigmoid(y)                    # binary=True reconstruction head
        h = y
    out_ref[...] = h.astype(out_ref.dtype)           # lane-dense (tm, Dp) store


def prepare_params(layers, input_dim, acts, *, act_dtype=None):
    """Pad, cast and pack the weights ONCE at model-init time (not per call).

    layers: list of (W, b) with W shape (in, out), b shape (1, out).
    Returns a dict with a bf16 weight slab (L, slot_in, slot_out), an
    act-dtype bias slab (L, slot_out) and the static layer metadata.
    First-layer rows / last-layer cols+bias are zero-padded to the lane-dense
    feature dim Dp so the in-kernel x load / out store are full-width.
    """
    if act_dtype is None:
        act_dtype = _default_act_dtype()
    n_layers = len(layers)
    assert len(acts) == n_layers
    Dp = _round_up(input_dim, _LANE)

    dims = []
    for li, (w, _) in enumerate(layers):
        din, dout = int(w.shape[0]), int(w.shape[1])
        if li == 0:
            din = Dp
        if li == n_layers - 1:
            dout = Dp
        dims.append((din, dout))

    slot_in = _round_up(max(d for d, _ in dims), _SUBLANE)
    slot_out = _round_up(max(d for _, d in dims), _LANE)
    w_slab = np.zeros((n_layers, slot_in, slot_out), np.float32)
    b_slab = np.zeros((n_layers, slot_out), np.float32)
    for li, (w, b) in enumerate(layers):
        w = np.asarray(w, np.float32)
        b = np.asarray(b, np.float32).reshape(1, -1)
        w_slab[li, :w.shape[0], :w.shape[1]] = w
        b_slab[li, :b.shape[1]] = b[0]

    return dict(
        w_slab=jnp.asarray(w_slab, jnp.bfloat16),
        b_slab=jnp.asarray(b_slab, act_dtype),
        dims=tuple(dims),
        acts=tuple(acts),
        input_dim=int(input_dim),
        padded_dim=Dp,
        act_dtype=act_dtype,
    )


def vade_pretrain_forward(x, params, *, tm=None, out_dtype=jnp.float32):
    """Run the VaDE pre-train forward pass. `params` comes from prepare_params.

    out_dtype=jnp.bfloat16 halves the output HBM stream if downstream code
    tolerates ~4e-3 resolution; default f32 for tighter agreement.
    """
    N, D = x.shape
    assert D == params["input_dim"]
    Dp = params["padded_dim"]

    num_tc = _num_tensorcores_per_chip()
    if tm is None:
        tm = _choose_tm(N, num_tc)
    tm = max(_SUBLANE, _round_up(int(tm), _SUBLANE))
    Np = _round_up(N, tm)                     # ragged batch -> zero-pad rows

    # Pad rows to a tile multiple / features to the lane-dense width, and cast
    # to bf16 at the HBM boundary (halves the dominant input stream).
    xp = jnp.pad(x, ((0, Np - N), (0, Dp - D))).astype(jnp.bfloat16)

    kernel = functools.partial(
        _vade_kernel,
        dims=params["dims"], acts=params["acts"], act_dtype=params["act_dtype"])

    out = pl.pallas_call(
        kernel,
        out_shape=jax.ShapeDtypeStruct((Np, Dp), out_dtype),
        grid_spec=pltpu.PrefetchScalarGridSpec(
            num_scalar_prefetch=0,
            grid=(Np // tm,),
            in_specs=[
                # x tiled over the batch (lane-dense, bf16)
                pl.BlockSpec((tm, Dp), lambda i: (i, 0)),
                # packed weight / bias slabs: full-array blocks with constant
                # index_maps -> VMEM resident, reused across every batch tile
                pl.BlockSpec(params["w_slab"].shape, lambda i: (0, 0, 0)),
                pl.BlockSpec(params["b_slab"].shape, lambda i: (0, 0)),
            ],
            out_specs=pl.BlockSpec((tm, Dp), lambda i: (i, 0)),
        ),
        compiler_params=pltpu.CompilerParams(
            dimension_semantics=("parallel",)),
    )(xp, params["w_slab"], params["b_slab"])

    return out[:N, :D]


def init_params(key, dims):
    """Deterministic Kaiming-ish init for each Linear(in, out)."""
    layers = []
    for (din, dout) in dims:
        key, kw, kb = jax.random.split(key, 3)
        scale = 1.0 / np.sqrt(din)
        w = jax.random.uniform(kw, (din, dout), jnp.float32, -scale, scale)
        b = jax.random.uniform(kb, (1, dout), jnp.float32, -scale, scale)
        layers.append((w, b))
    return layers


def reference_forward(x, layers, acts):
    """Pure-JAX f32 reference matching the PyTorch forward semantics."""
    h = x
    for (w, b), act in zip(layers, acts):
        h = h @ w + b
        if act == "relu":
            h = jax.nn.relu(h)
        elif act == "sigmoid":
            h = jax.nn.sigmoid(h)
    return h


if __name__ == "__main__":
    # Small shapes consistent with the flattened-MLP VaDE forward.
    N, D = 16, 64                 # batch, input_dim
    h1, h2, h3 = 32, 32, 64       # encoder hidden dims
    latent = 16

    layer_dims = [
        (D, h1), (h1, h2), (h2, h3),       # encoder
        (h3, latent),                      # encoder_mu
        (latent, h3), (h3, h2), (h2, h1),  # decoder hidden
        (h1, D),                           # reconstruction head
    ]
    acts = ("relu", "relu", "relu", None,  # encoder + encoder_mu (linear)
            "relu", "relu", "relu", "sigmoid")

    key = jax.random.PRNGKey(0)
    key, kx = jax.random.split(key)
    x = jax.random.normal(kx, (N, D), jnp.float32)
    layers = init_params(key, layer_dims)

    # Pack / pad / cast the weights once, at model-init time.
    params = prepare_params(layers, D, acts)

    recon = vade_pretrain_forward(x, params)
    recon = jax.block_until_ready(recon)

    ref = reference_forward(x, layers, acts)
    # bf16 MXU operands (and bf16 elementwise on v6e/v7x) vs f32 reference:
    # sigmoid outputs agree to ~1e-2; allow generous absolute slack.
    np.testing.assert_allclose(np.asarray(recon), np.asarray(ref),
                               rtol=0.0, atol=2e-2)
    assert recon.shape == (N, D)
    print("KERNEL_OK")
</pallas_src>

<mosaic_0001>
module attributes {stable_mosaic.version = 11 : i64} {
  func.func @_vade_kernel(%arg0: i32, %arg1: memref<16x128xbf16, #tpu.memory_space<vmem>>, %arg2: memref<8x128x128xbf16, #tpu.memory_space<vmem>>, %arg3: memref<8x128xbf16, #tpu.memory_space<vmem>>, %arg4: memref<16x128xf32, #tpu.memory_space<vmem>>) attributes {dimension_semantics = [#tpu.dimension_semantics<parallel>], iteration_bounds = array<i64: 1>, scalar_prefetch = 0 : i64, scratch_operands = 0 : i64, tpu.core_type = #tpu.core_type<tc>, window_params = [{transform_indices = @transform_0, window_bounds = array<i64: 16, 128>}, {pipeline_mode = #tpu.pipeline_mode<synchronous>, transform_indices = @transform_1, window_bounds = array<i64: 8, 128, 128>}, {pipeline_mode = #tpu.pipeline_mode<synchronous>, transform_indices = @transform_2, window_bounds = array<i64: 8, 128>}, {transform_indices = @transform_3, window_bounds = array<i64: 16, 128>}]} {
    %c0 = arith.constant 0 : index
    %c0_0 = arith.constant 0 : index
    %0 = vector.load %arg1[%c0, %c0_0] : memref<16x128xbf16, #tpu.memory_space<vmem>>, vector<16x128xbf16>
    %c0_1 = arith.constant 0 : index
    %c0_2 = arith.constant 0 : index
    %c0_3 = arith.constant 0 : index
    %1 = vector.load %arg2[%c0_1, %c0_2, %c0_3] : memref<8x128x128xbf16, #tpu.memory_space<vmem>>, vector<1x128x32xbf16>
    %2 = vector.shape_cast %1 : vector<1x128x32xbf16> to vector<128x32xbf16>
    %c0_4 = arith.constant 0 : index
    %c0_5 = arith.constant 0 : index
    %3 = vector.load %arg3[%c0_4, %c0_5] : memref<8x128xbf16, #tpu.memory_space<vmem>>, vector<1x32xbf16>
    %cst = arith.constant dense<0.000000e+00> : vector<16x32xf32>
    %4 = tpu.matmul %0, %2, %cst {dimension_numbers = #tpu.dot_dimension_numbers<[1], [0], [0], [1], [0, 0, 1, 1], [], []>} : vector<16x128xbf16>, vector<128x32xbf16>, vector<16x32xf32> -> vector<16x32xf32>
    %5 = arith.truncf %4 : vector<16x32xf32> to vector<16x32xbf16>
    %6 = vector.broadcast %3 : vector<1x32xbf16> to vector<16x32xbf16>
    %7 = arith.addf %5, %6 : vector<16x32xbf16>
    %cst_6 = arith.constant 0.000000e+00 : bf16
    %8 = vector.broadcast %cst_6 : bf16 to vector<16x32xbf16>
    %9 = arith.maximumf %7, %8 : vector<16x32xbf16>
    %c1 = arith.constant 1 : index
    %c0_7 = arith.constant 0 : index
    %c0_8 = arith.constant 0 : index
    %10 = vector.load %arg2[%c1, %c0_7, %c0_8] : memref<8x128x128xbf16, #tpu.memory_space<vmem>>, vector<1x32x32xbf16>
    %11 = vector.shape_cast %10 : vector<1x32x32xbf16> to vector<32x32xbf16>
    %c1_9 = arith.constant 1 : index
    %c0_10 = arith.constant 0 : index
    %12 = vector.load %arg3[%c1_9, %c0_10] : memref<8x128xbf16, #tpu.memory_space<vmem>>, vector<1x32xbf16>
    %cst_11 = arith.constant dense<0.000000e+00> : vector<16x32xf32>
    %13 = tpu.matmul %9, %11, %cst_11 {dimension_numbers = #tpu.dot_dimension_numbers<[1], [0], [0], [1], [0, 0, 1, 1], [], []>} : vector<16x32xbf16>, vector<32x32xbf16>, vector<16x32xf32> -> vector<16x32xf32>
    %14 = arith.truncf %13 : vector<16x32xf32> to vector<16x32xbf16>
    %15 = vector.broadcast %12 : vector<1x32xbf16> to vector<16x32xbf16>
    %16 = arith.addf %14, %15 : vector<16x32xbf16>
    %cst_12 = arith.constant 0.000000e+00 : bf16
    %17 = vector.broadcast %cst_12 : bf16 to vector<16x32xbf16>
    %18 = arith.maximumf %16, %17 : vector<16x32xbf16>
    %c2 = arith.constant 2 : index
    %c0_13 = arith.constant 0 : index
    %c0_14 = arith.constant 0 : index
    %19 = vector.load %arg2[%c2, %c0_13, %c0_14] : memref<8x128x128xbf16, #tpu.memory_space<vmem>>, vector<1x32x64xbf16>
    %20 = vector.shape_cast %19 : vector<1x32x64xbf16> to vector<32x64xbf16>
    %c2_15 = arith.constant 2 : index
    %c0_16 = arith.constant 0 : index
    %21 = vector.load %arg3[%c2_15, %c0_16] : memref<8x128xbf16, #tpu.memory_space<vmem>>, vector<1x64xbf16>
    %cst_17 = arith.constant dense<0.000000e+00> : vector<16x64xf32>
    %22 = tpu.matmul %18, %20, %cst_17 {dimension_numbers = #tpu.dot_dimension_numbers<[1], [0], [0], [1], [0, 0, 1, 1], [], []>} : vector<16x32xbf16>, vector<32x64xbf16>, vector<16x64xf32> -> vector<16x64xf32>
    %23 = arith.truncf %22 : vector<16x64xf32> to vector<16x64xbf16>
    %24 = vector.broadcast %21 : vector<1x64xbf16> to vector<16x64xbf16>
    %25 = arith.addf %23, %24 : vector<16x64xbf16>
    %cst_18 = arith.constant 0.000000e+00 : bf16
    %26 = vector.broadcast %cst_18 : bf16 to vector<16x64xbf16>
    %27 = arith.maximumf %25, %26 : vector<16x64xbf16>
    %c3 = arith.constant 3 : index
    %c0_19 = arith.constant 0 : index
    %c0_20 = arith.constant 0 : index
    %28 = vector.load %arg2[%c3, %c0_19, %c0_20] : memref<8x128x128xbf16, #tpu.memory_space<vmem>>, vector<1x64x16xbf16>
    %29 = vector.shape_cast %28 : vector<1x64x16xbf16> to vector<64x16xbf16>
    %c3_21 = arith.constant 3 : index
    %c0_22 = arith.constant 0 : index
    %30 = vector.load %arg3[%c3_21, %c0_22] : memref<8x128xbf16, #tpu.memory_space<vmem>>, vector<1x16xbf16>
    %cst_23 = arith.constant dense<0.000000e+00> : vector<16x16xf32>
    %31 = tpu.matmul %27, %29, %cst_23 {dimension_numbers = #tpu.dot_dimension_numbers<[1], [0], [0], [1], [0, 0, 1, 1], [], []>} : vector<16x64xbf16>, vector<64x16xbf16>, vector<16x16xf32> -> vector<16x16xf32>
    %32 = arith.truncf %31 : vector<16x16xf32> to vector<16x16xbf16>
    %33 = vector.broadcast %30 : vector<1x16xbf16> to vector<16x16xbf16>
    %34 = arith.addf %32, %33 : vector<16x16xbf16>
    %c4 = arith.constant 4 : index
    %c0_24 = arith.constant 0 : index
    %c0_25 = arith.constant 0 : index
    %35 = vector.load %arg2[%c4, %c0_24, %c0_25] : memref<8x128x128xbf16, #tpu.memory_space<vmem>>, vector<1x16x64xbf16>
    %36 = vector.shape_cast %35 : vector<1x16x64xbf16> to vector<16x64xbf16>
    %c4_26 = arith.constant 4 : index
    %c0_27 = arith.constant 0 : index
    %37 = vector.load %arg3[%c4_26, %c0_27] : memref<8x128xbf16, #tpu.memory_space<vmem>>, vector<1x64xbf16>
    %cst_28 = arith.constant dense<0.000000e+00> : vector<16x64xf32>
    %38 = tpu.matmul %34, %36, %cst_28 {dimension_numbers = #tpu.dot_dimension_numbers<[1], [0], [0], [1], [0, 0, 1, 1], [], []>} : vector<16x16xbf16>, vector<16x64xbf16>, vector<16x64xf32> -> vector<16x64xf32>
    %39 = arith.truncf %38 : vector<16x64xf32> to vector<16x64xbf16>
    %40 = vector.broadcast %37 : vector<1x64xbf16> to vector<16x64xbf16>
    %41 = arith.addf %39, %40 : vector<16x64xbf16>
    %cst_29 = arith.constant 0.000000e+00 : bf16
    %42 = vector.broadcast %cst_29 : bf16 to vector<16x64xbf16>
    %43 = arith.maximumf %41, %42 : vector<16x64xbf16>
    %c5 = arith.constant 5 : index
    %c0_30 = arith.constant 0 : index
    %c0_31 = arith.constant 0 : index
    %44 = vector.load %arg2[%c5, %c0_30, %c0_31] : memref<8x128x128xbf16, #tpu.memory_space<vmem>>, vector<1x64x32xbf16>
    %45 = vector.shape_cast %44 : vector<1x64x32xbf16> to vector<64x32xbf16>
    %c5_32 = arith.constant 5 : index
    %c0_33 = arith.constant 0 : index
    %46 = vector.load %arg3[%c5_32, %c0_33] : memref<8x128xbf16, #tpu.memory_space<vmem>>, vector<1x32xbf16>
    %cst_34 = arith.constant dense<0.000000e+00> : vector<16x32xf32>
    %47 = tpu.matmul %43, %45, %cst_34 {dimension_numbers = #tpu.dot_dimension_numbers<[1], [0], [0], [1], [0, 0, 1, 1], [], []>} : vector<16x64xbf16>, vector<64x32xbf16>, vector<16x32xf32> -> vector<16x32xf32>
    %48 = arith.truncf %47 : vector<16x32xf32> to vector<16x32xbf16>
    %49 = vector.broadcast %46 : vector<1x32xbf16> to vector<16x32xbf16>
    %50 = arith.addf %48, %49 : vector<16x32xbf16>
    %cst_35 = arith.constant 0.000000e+00 : bf16
    %51 = vector.broadcast %cst_35 : bf16 to vector<16x32xbf16>
    %52 = arith.maximumf %50, %51 : vector<16x32xbf16>
    %c6 = arith.constant 6 : index
    %c0_36 = arith.constant 0 : index
    %c0_37 = arith.constant 0 : index
    %53 = vector.load %arg2[%c6, %c0_36, %c0_37] : memref<8x128x128xbf16, #tpu.memory_space<vmem>>, vector<1x32x32xbf16>
    %54 = vector.shape_cast %53 : vector<1x32x32xbf16> to vector<32x32xbf16>
    %c6_38 = arith.constant 6 : index
    %c0_39 = arith.constant 0 : index
    %55 = vector.load %arg3[%c6_38, %c0_39] : memref<8x128xbf16, #tpu.memory_space<vmem>>, vector<1x32xbf16>
    %cst_40 = arith.constant dense<0.000000e+00> : vector<16x32xf32>
    %56 = tpu.matmul %52, %54, %cst_40 {dimension_numbers = #tpu.dot_dimension_numbers<[1], [0], [0], [1], [0, 0, 1, 1], [], []>} : vector<16x32xbf16>, vector<32x32xbf16>, vector<16x32xf32> -> vector<16x32xf32>
    %57 = arith.truncf %56 : vector<16x32xf32> to vector<16x32xbf16>
    %58 = vector.broadcast %55 : vector<1x32xbf16> to vector<16x32xbf16>
    %59 = arith.addf %57, %58 : vector<16x32xbf16>
    %cst_41 = arith.constant 0.000000e+00 : bf16
    %60 = vector.broadcast %cst_41 : bf16 to vector<16x32xbf16>
    %61 = arith.maximumf %59, %60 : vector<16x32xbf16>
    %c7 = arith.constant 7 : index
    %c0_42 = arith.constant 0 : index
    %c0_43 = arith.constant 0 : index
    %62 = vector.load %arg2[%c7, %c0_42, %c0_43] : memref<8x128x128xbf16, #tpu.memory_space<vmem>>, vector<1x32x128xbf16>
    %63 = vector.shape_cast %62 : vector<1x32x128xbf16> to vector<32x128xbf16>
    %c7_44 = arith.constant 7 : index
    %c0_45 = arith.constant 0 : index
    %64 = vector.load %arg3[%c7_44, %c0_45] : memref<8x128xbf16, #tpu.memory_space<vmem>>, vector<1x128xbf16>
    %cst_46 = arith.constant dense<0.000000e+00> : vector<16x128xf32>
    %65 = tpu.matmul %61, %63, %cst_46 {dimension_numbers = #tpu.dot_dimension_numbers<[1], [0], [0], [1], [0, 0, 1, 1], [], []>} : vector<16x32xbf16>, vector<32x128xbf16>, vector<16x128xf32> -> vector<16x128xf32>
    %66 = arith.truncf %65 : vector<16x128xf32> to vector<16x128xbf16>
    %67 = vector.broadcast %64 : vector<1x128xbf16> to vector<16x128xbf16>
    %68 = arith.addf %66, %67 : vector<16x128xbf16>
    %69 = arith.negf %68 : vector<16x128xbf16>
    %70 = math.exp %69 : vector<16x128xbf16>
    %cst_47 = arith.constant 1.000000e+00 : bf16
    %71 = vector.broadcast %cst_47 : bf16 to vector<16x128xbf16>
    %72 = arith.addf %71, %70 : vector<16x128xbf16>
    %73 = arith.divf %71, %72 : vector<16x128xbf16>
    %74 = arith.extf %73 : vector<16x128xbf16> to vector<16x128xf32>
    %c0_48 = arith.constant 0 : index
    %c0_49 = arith.constant 0 : index
    %75 = vector.load %arg4[%c0_48, %c0_49] : memref<16x128xf32, #tpu.memory_space<vmem>>, vector<16x128xf32>
    tpu.vector_store %arg4[%c0_48, %c0_49], %74 {strides = array<i32>} : memref<16x128xf32, #tpu.memory_space<vmem>>, vector<16x128xf32>,
    return
  }
  func.func @transform_0(%arg0: i32) -> (i32, i32) {
    %c0_i32 = arith.constant 0 : i32
    %c0_i32_0 = arith.constant 0 : i32
    return %arg0, %c0_i32 : i32, i32
  }
  func.func @transform_1(%arg0: i32) -> (i32, i32, i32) {
    %c0_i32 = arith.constant 0 : i32
    %c0_i32_0 = arith.constant 0 : i32
    %c0_i32_1 = arith.constant 0 : i32
    %c0_i32_2 = arith.constant 0 : i32
    return %c0_i32, %c0_i32_0, %c0_i32_1 : i32, i32, i32
  }
  func.func @transform_2(%arg0: i32) -> (i32, i32) {
    %c0_i32 = arith.constant 0 : i32
    %c0_i32_0 = arith.constant 0 : i32
    %c0_i32_1 = arith.constant 0 : i32
    return %c0_i32, %c0_i32_0 : i32, i32
  }
  func.func @transform_3(%arg0: i32) -> (i32, i32) {
    %c0_i32 = arith.constant 0 : i32
    %c0_i32_0 = arith.constant 0 : i32
    return %arg0, %c0_i32 : i32, i32
  }
}

</mosaic_0001>

<llo_original>
// kernel: tpu_custom_call.1
$region0: #{tpu_custom_call.1}
  #allocation0 [shape = 'u32[]', space=smem, size = 0x4, offset = 0x4, fixed_abs, tag = 'smem constant byte address 0x4 - core index']
  #allocation1 [shape = 'u32[144,128]{1,0:T(1,128)}', space=vmem, size = 0x12000, scoped, tag = 'internal scratch']
  %s0 = inlined_call_operand.hbm [shape: bf16[16,128], index: 0, kind: input, shape index: {}]
  %s1 = inlined_call_operand.hbm [shape: bf16[8,128,128], index: 1, kind: input, shape index: {}]
  %s2 = inlined_call_operand.vmem [shape: bf16[8,128], index: 2, kind: input, shape index: {}]
  %s3 = inlined_call_operand.hbm [shape: f32[16,128], index: 3, kind: output, shape index: {}]
  %s4 = sld [smem:[#allocation0]]
  $region30: #{tpu_custom_call.1} parent=0
    _
  %s6 = ssub.s32 1, %s4
  %s7 = scalar_select 0, %s6, %s4
  $region1: #{tpu_custom_call.1} parent=0
    #allocation2 [shape = 'u8[4096]{0}', space=vmem, size = 0x1000, scoped, tag = 'input window, operand 0, single buffered']
    #allocation3 [shape = 's32[1]{0}', space=sflag, size = 0x4, scoped, tag = 'scoped memory for tpu_custom_call.1']
    #allocation4 [shape = 's32[1]{0}', space=sflag, size = 0x4, scoped, tag = 'scoped memory for tpu_custom_call.1']
    #allocation5 [shape = 'u8[262144]{0}', space=vmem, size = 0x40000, scoped, tag = 'input window, operand 1, single buffered']
    #allocation6 [shape = 's32[1]{0}', space=sflag, size = 0x4, scoped, tag = 'scoped memory for tpu_custom_call.1']
    #allocation7 [shape = 'u8[8192]{0}', space=vmem, size = 0x2000, scoped, tag = 'output window, operand 0, single buffered']
    %8 = vsyncpa [#allocation3], 0
    %9 = vsyncpa [#allocation6], 0
    %10 = vsyncpa [#allocation4], 0
    // Predicated region
    $region2: #{tpu_custom_call.1} parent=1 // pred_check
      _
    $region3: #{tpu_custom_call.1} parent=1 // pred_check_branch
      %12 = sbr.rel (0) target = $region5
    $region4: #{tpu_custom_call.1} parent=1 // pred_region
      %s14 = ssub.s32 128, 128
      %15 = vsyncadd [#allocation3], %s14
      %s16 = sshll.u32 [#allocation2], 4
      %s17 = int_to_ptr.vmem [resolvable:$true] %s16
      %22 = dma.hbm_to_vmem [thread:$0]  %s0, 128, %s17, [#allocation3], 64, 64, 4
    $region5: #{tpu_custom_call.1} parent=1 // pred_fallthru
      _
    // Predicated region
    $region6: #{tpu_custom_call.1} parent=1 // pred_check
      _
    $region7: #{tpu_custom_call.1} parent=1 // pred_check_branch
      %24 = sbr.rel (0) target = $region9
    $region8: #{tpu_custom_call.1} parent=1 // pred_region
      %s26 = ssub.s32 8192, 8192
      %27 = vsyncadd [#allocation6], %s26
      %s28 = sshll.u32 [#allocation5], 4
      %s29 = int_to_ptr.vmem [resolvable:$true] %s28
      %34 = dma.hbm_to_vmem [thread:$0]  %s1, 8192, %s29, [#allocation6], 64, 64, 4
    $region9: #{tpu_custom_call.1} parent=1 // pred_fallthru
      _
    // Predicated region
    $region10: #{tpu_custom_call.1} parent=1 // pred_check
      _
    $region11: #{tpu_custom_call.1} parent=1 // pred_check_branch
      %36 = sbr.rel (0) target = $region13
    $region12: #{tpu_custom_call.1} parent=1 // pred_region
      _
    $region13: #{tpu_custom_call.1} parent=1 // pred_fallthru
      _
    // Predicated region
    $region14: #{tpu_custom_call.1} parent=1 // pred_check
      _
    $region15: #{tpu_custom_call.1} parent=1 // pred_check_branch
      %38 = sbr.rel (0) target = $region17
    $region16: #{tpu_custom_call.1} parent=1 // pred_region
      %39 = dma.done [#allocation3], 128
    $region17: #{tpu_custom_call.1} parent=1 // pred_fallthru
      _
    // Predicated region
    $region18: #{tpu_custom_call.1} parent=1 // pred_check
      _
    $region19: #{tpu_custom_call.1} parent=1 // pred_check_branch
      %41 = sbr.rel (0) target = $region21
    $region20: #{tpu_custom_call.1} parent=1 // pred_region
      %42 = dma.done [#allocation6], 8192
    $region21: #{tpu_custom_call.1} parent=1 // pred_fallthru
      _
    %v45 = vld [vmem:[#allocation2] sm:$0xf]
    %v46 = vld [vmem:[#allocation2 + $0x4] sm:$0xf]
    %v47 = vld [vmem:[#allocation5] sm:$0xf]
    %v48 = vld [vmem:[#allocation5 + $0x4] sm:$0xf]
    %v49 = vld [vmem:[#allocation5 + $0x8] sm:$0xf]
    %v50 = vld [vmem:[#allocation5 + $0xc] sm:$0xf]
    %v51 = vld [vmem:[#allocation5 + $0x10] sm:$0xf]
    %v52 = vld [vmem:[#allocation5 + $0x14] sm:$0xf]
    %v53 = vld [vmem:[#allocation5 + $0x18] sm:$0xf]
    %v54 = vld [vmem:[#allocation5 + $0x1c] sm:$0xf]
    %v55 = vld [vmem:[#allocation5 + $0x20] sm:$0xf]
    %v56 = vld [vmem:[#allocation5 + $0x24] sm:$0xf]
    %v57 = vld [vmem:[#allocation5 + $0x28] sm:$0xf]
    %v58 = vld [vmem:[#allocation5 + $0x2c] sm:$0xf]
    %v59 = vld [vmem:[#allocation5 + $0x30] sm:$0xf]
    %v60 = vld [vmem:[#allocation5 + $0x34] sm:$0xf]
    %v61 = vld [vmem:[#allocation5 + $0x38] sm:$0xf]
    %v62 = vld [vmem:[#allocation5 + $0x3c] sm:$0xf]
    %v63 = vld [vmem:[%s2] sm:$0x1]
    %v66 = vunpack.c.l.b16 %v45
    %v67 = vunpack.c.l.b16 %v46
    %v68 = vpack.c.b16 %v67, %v66
    %v86 = vunpack.c.l.b16 %v47
    %v87 = vunpack.c.l.b16 %v48
    %v88 = vunpack.c.l.b16 %v49
    %v89 = vunpack.c.l.b16 %v50
    %v90 = vunpack.c.l.b16 %v51
    %v91 = vunpack.c.l.b16 %v52
    %v92 = vunpack.c.l.b16 %v53
    %v93 = vunpack.c.l.b16 %v54
    %v94 = vunpack.c.l.b16 %v55
    %v95 = vunpack.c.l.b16 %v56
    %v96 = vunpack.c.l.b16 %v57
    %v97 = vunpack.c.l.b16 %v58
    %v98 = vunpack.c.l.b16 %v59
    %v99 = vunpack.c.l.b16 %v60
    %v100 = vunpack.c.l.b16 %v61
    %v101 = vunpack.c.l.b16 %v62
    %v102 = vpack.c.b16 %v87, %v86
    %v103 = vpack.c.b16 %v89, %v88
    %v104 = vpack.c.b16 %v91, %v90
    %v105 = vpack.c.b16 %v93, %v92
    %v106 = vpack.c.b16 %v95, %v94
    %v107 = vpack.c.b16 %v97, %v96
    %v108 = vpack.c.b16 %v99, %v98
    %v109 = vpack.c.b16 %v101, %v100
    %118 = vmatprep.subr.bf16.mxu0 0
    %119 = vmatpush1.bf16.msra.mxu0 %v102
    %120 = vmatprep.subr.bf16.mxu0 0
    %121 = vmatpush1.bf16.msra.mxu0 %v103
    %122 = vmatprep.subr.bf16.mxu0 0
    %123 = vmatpush1.bf16.msra.mxu0 %v104
    %124 = vmatprep.subr.bf16.mxu0 0
    %125 = vmatpush1.bf16.msra.mxu0 %v105
    %126 = vmatprep.subr.bf16.mxu0 0
    %127 = vmatpush1.bf16.msra.mxu0 %v106
    %128 = vmatprep.subr.bf16.mxu0 0
    %129 = vmatpush1.bf16.msra.mxu0 %v107
    %130 = vmatprep.subr.bf16.mxu0 0
    %131 = vmatpush1.bf16.msra.mxu0 %v108
    %132 = vmatprep.subr.bf16.mxu0 0
    %133 = vmatpush1.bf16.msra.mxu0 %v109
    %134 = vmatprep.subr.bf16.mxu0 0
    %135 = vmatpush1.bf16.msra.mxu0 0
    %136 = vmatprep.subr.bf16.mxu0 0
    %137 = vmatpush1.bf16.msra.mxu0 0
    %138 = vmatprep.subr.bf16.mxu0 0
    %139 = vmatpush1.bf16.msra.mxu0 0
    %140 = vmatprep.subr.bf16.mxu0 0
    %141 = vmatpush1.bf16.msra.mxu0 0
    %142 = vmatprep.subr.bf16.mxu0 0
    %143 = vmatpush1.bf16.msra.mxu0 0
    %144 = vmatprep.subr.bf16.mxu0 0
    %145 = vmatpush1.bf16.msra.mxu0 0
    %146 = vmatprep.subr.bf16.mxu0 0
    %147 = vmatpush1.bf16.msra.mxu0 0
    %148 = vmatprep.subr.bf16.mxu0 0
    %149 = vmatpush1.bf16.msra.mxu0 0
    %150 = vmatprep.mubr.bf16.mxu0 0
    %151 = vmatmul.mubr.bf16.gmra.mrb[0].mxu0 %v68
    %v152 = vpop.f32.mrb[0].mxu0
    %v153 = vadd.f32 0.0, %v152
    %v154 = vpop.f32.mrb[0].mxu0
    %v155 = vpop.f32.mrb[0].mxu0
    %v156 = vadd.f32 0.0, %v155
    %v157 = vpop.f32.mrb[0].mxu0
    %158 = vdwg.mxu0
    %v159 = vpack.c.bf16 %v156, %v153
    %v161 = vpack.i.b16 %v63, %v63
    %v163 = vlaneseq
    %v164 = vshrl.u32 %v163, 7
    %v165 = vsub.s32 0, %v164
    %v166 = vrot.slane %v161, %v165
    %v167 = vadd.bf16 %v159, %v166
    %v168 = vmax.bf16 %v167, 0
    %s169 = scalar_lea.vmem [#allocation5], 64
    %v170 = vld [vmem:[%s169] sm:$0xf]
    %v171 = vld [vmem:[%s169 + $0x4] sm:$0xf]
    %v172 = vld [vmem:[%s169 + $0x8] sm:$0xf]
    %v173 = vld [vmem:[%s169 + $0xc] sm:$0xf]
    %v178 = vunpack.c.l.b16 %v170
    %v179 = vunpack.c.l.b16 %v171
    %v180 = vunpack.c.l.b16 %v172
    %v181 = vunpack.c.l.b16 %v173
    %v182 = vpack.c.b16 %v179, %v178
    %v183 = vpack.c.b16 %v181, %v180
    %vm186 = vcmask 261120
    %v188 = vsel %vm186, %v168, 0
    %190 = vmatprep.subr.bf16.mxu0 0
    %191 = vmatpush1.bf16.msra.mxu0 %v182
    %192 = vmatprep.subr.bf16.mxu0 0
    %193 = vmatpush1.bf16.msra.mxu0 %v183
    %194 = vmatprep.subr.bf16.mxu0 0
    %195 = vmatpush1.bf16.msra.mxu0 0
    %196 = vmatprep.subr.bf16.mxu0 0
    %197 = vmatpush1.bf16.msra.mxu0 0
    %198 = vmatprep.subr.bf16.mxu0 0
    %199 = vmatpush1.bf16.msra.mxu0 0
    %200 = vmatprep.subr.bf16.mxu0 0
    %201 = vmatpush1.bf16.msra.mxu0 0
    %202 = vmatprep.subr.bf16.mxu0 0
    %203 = vmatpush1.bf16.msra.mxu0 0
    %204 = vmatprep.subr.bf16.mxu0 0
    %205 = vmatpush1.bf16.msra.mxu0 0
    %206 = vmatprep.subr.bf16.mxu0 0
    %207 = vmatpush1.bf16.msra.mxu0 0
    %208 = vmatprep.subr.bf16.mxu0 0
    %209 = vmatpush1.bf16.msra.mxu0 0
    %210 = vmatprep.subr.bf16.mxu0 0
    %211 = vmatpush1.bf16.msra.mxu0 0
    %212 = vmatprep.subr.bf16.mxu0 0
    %213 = vmatpush1.bf16.msra.mxu0 0
    %214 = vmatprep.subr.bf16.mxu0 0
    %215 = vmatpush1.bf16.msra.mxu0 0
    %216 = vmatprep.subr.bf16.mxu0 0
    %217 = vmatpush1.bf16.msra.mxu0 0
    %218 = vmatprep.subr.bf16.mxu0 0
    %219 = vmatpush1.bf16.msra.mxu0 0
    %220 = vmatprep.subr.bf16.mxu0 0
    %221 = vmatpush1.bf16.msra.mxu0 0
    %222 = vmatprep.mubr.bf16.mxu0 0
    %223 = vmatmul.mubr.bf16.gmra.mrb[0].mxu0 %v188
    %v224 = vpop.f32.mrb[0].mxu0
    %v225 = vadd.f32 0.0, %v224
    %v226 = vpop.f32.mrb[0].mxu0
    %v227 = vpop.f32.mrb[0].mxu0
    %v228 = vadd.f32 0.0, %v227
    %v229 = vpop.f32.mrb[0].mxu0
    %230 = vdwg.mxu0
    %v231 = vpack.c.bf16 %v228, %v225
    %v232 = vshrl.u32 %v63, 16
    %v233 = vpack.i.b16 %v232, %v232
    %v235 = vlaneseq
    %v236 = vshrl.u32 %v235, 7
    %v237 = vsub.s32 0, %v236
    %v238 = vrot.slane %v233, %v237
    %v239 = vadd.bf16 %v231, %v238
    %v240 = vmax.bf16 %v239, 0
    %s241 = scalar_lea.vmem [#allocation5], 128
    %v242 = vld [vmem:[%s241] sm:$0xf]
    %v243 = vld [vmem:[%s241 + $0x4] sm:$0xf]
    %v244 = vld [vmem:[%s241 + $0x8] sm:$0xf]
    %v245 = vld [vmem:[%s241 + $0xc] sm:$0xf]
    %v246 = vld [vmem:[%s2] sm:$0x2]
    %v251 = vunpack.c.l.b16 %v242
    %v252 = vunpack.c.l.b16 %v243
    %v253 = vunpack.c.l.b16 %v244
    %v254 = vunpack.c.l.b16 %v245
    %v255 = vpack.c.b16 %v252, %v251
    %v256 = vpack.c.b16 %v254, %v253
    %v260 = vsel %vm186, %v240, 0
    %262 = vmatprep.subr.bf16.mxu0 0
    %263 = vmatpush1.bf16.msra.mxu0 %v255
    %264 = vmatprep.subr.bf16.mxu0 0
    %265 = vmatpush1.bf16.msra.mxu0 %v256
    %266 = vmatprep.subr.bf16.mxu0 0
    %267 = vmatpush1.bf16.msra.mxu0 0
    %268 = vmatprep.subr.bf16.mxu0 0
    %269 = vmatpush1.bf16.msra.mxu0 0
    %270 = vmatprep.subr.bf16.mxu0 0
    %271 = vmatpush1.bf16.msra.mxu0 0
    %272 = vmatprep.subr.bf16.mxu0 0
    %273 = vmatpush1.bf16.msra.mxu0 0
    %274 = vmatprep.subr.bf16.mxu0 0
    %275 = vmatpush1.bf16.msra.mxu0 0
    %276 = vmatprep.subr.bf16.mxu0 0
    %277 = vmatpush1.bf16.msra.mxu0 0
    %278 = vmatprep.subr.bf16.mxu0 0
    %279 = vmatpush1.bf16.msra.mxu0 0
    %280 = vmatprep.subr.bf16.mxu0 0
    %281 = vmatpush1.bf16.msra.mxu0 0
    %282 = vmatprep.subr.bf16.mxu0 0
    %283 = vmatpush1.bf16.msra.mxu0 0
    %284 = vmatprep.subr.bf16.mxu0 0
    %285 = vmatpush1.bf16.msra.mxu0 0
    %286 = vmatprep.subr.bf16.mxu0 0
    %287 = vmatpush1.bf16.msra.mxu0 0
    %288 = vmatprep.subr.bf16.mxu0 0
    %289 = vmatpush1.bf16.msra.mxu0 0
    %290 = vmatprep.subr.bf16.mxu0 0
    %291 = vmatpush1.bf16.msra.mxu0 0
    %292 = vmatprep.subr.bf16.mxu0 0
    %293 = vmatpush1.bf16.msra.mxu0 0
    %294 = vmatprep.mubr.bf16.mxu0 0
    %295 = vmatmul.mubr.bf16.gmra.mrb[0].mxu0 %v260
    %v296 = vpop.f32.mrb[0].mxu0
    %v297 = vadd.f32 0.0, %v296
    %v298 = vpop.f32.mrb[0].mxu0
    %v299 = vpop.f32.mrb[0].mxu0
    %v300 = vadd.f32 0.0, %v299
    %v301 = vpop.f32.mrb[0].mxu0
    %302 = vdwg.mxu0
    %v303 = vpack.c.bf16 %v300, %v297
    %v305 = vpack.i.b16 %v246, %v246
    %v307 = vlaneseq
    %v308 = vshrl.u32 %v307, 7
    %v309 = vsub.s32 1, %v308
    %v310 = vrot.slane %v305, %v309
    %v311 = vadd.bf16 %v303, %v310
    %v312 = vmax.bf16 %v311, 0
    %s313 = scalar_lea.vmem [#allocation5], 192
    %v314 = vld [vmem:[%s313] sm:$0xf]
    %v315 = vld [vmem:[%s313 + $0x4] sm:$0xf]
    %v316 = vld [vmem:[%s313 + $0x8] sm:$0xf]
    %v317 = vld [vmem:[%s313 + $0xc] sm:$0xf]
    %v318 = vld [vmem:[%s313 + $0x10] sm:$0xf]
    %v319 = vld [vmem:[%s313 + $0x14] sm:$0xf]
    %v320 = vld [vmem:[%s313 + $0x18] sm:$0xf]
    %v321 = vld [vmem:[%s313 + $0x1c] sm:$0xf]
    %v330 = vunpack.c.l.b16 %v314
    %v331 = vunpack.c.l.b16 %v315
    %v332 = vunpack.c.l.b16 %v316
    %v333 = vunpack.c.l.b16 %v317
    %v334 = vunpack.c.l.b16 %v318
    %v335 = vunpack.c.l.b16 %v319
    %v336 = vunpack.c.l.b16 %v320
    %v337 = vunpack.c.l.b16 %v321
    %v338 = vpack.c.b16 %v331, %v330
    %v339 = vpack.c.b16 %v333, %v332
    %v340 = vpack.c.b16 %v335, %v334
    %v341 = vpack.c.b16 %v337, %v336
    %vm346 = vcmask 523264
    %v348 = vsel %vm346, %v312, 0
    %350 = vmatprep.subr.bf16.mxu0 0
    %351 = vmatpush1.bf16.msra.mxu0 %v338
    %352 = vmatprep.subr.bf16.mxu0 0
    %353 = vmatpush1.bf16.msra.mxu0 %v339
    %354 = vmatprep.subr.bf16.mxu0 0
    %355 = vmatpush1.bf16.msra.mxu0 %v340
    %356 = vmatprep.subr.bf16.mxu0 0
    %357 = vmatpush1.bf16.msra.mxu0 %v341
    %358 = vmatprep.subr.bf16.mxu0 0
    %359 = vmatpush1.bf16.msra.mxu0 0
    %360 = vmatprep.subr.bf16.mxu0 0
    %361 = vmatpush1.bf16.msra.mxu0 0
    %362 = vmatprep.subr.bf16.mxu0 0
    %363 = vmatpush1.bf16.msra.mxu0 0
    %364 = vmatprep.subr.bf16.mxu0 0
    %365 = vmatpush1.bf16.msra.mxu0 0
    %366 = vmatprep.subr.bf16.mxu0 0
    %367 = vmatpush1.bf16.msra.mxu0 0
    %368 = vmatprep.subr.bf16.mxu0 0
    %369 = vmatpush1.bf16.msra.mxu0 0
    %370 = vmatprep.subr.bf16.mxu0 0
    %371 = vmatpush1.bf16.msra.mxu0 0
    %372 = vmatprep.subr.bf16.mxu0 0
    %373 = vmatpush1.bf16.msra.mxu0 0
    %374 = vmatprep.subr.bf16.mxu0 0
    %375 = vmatpush1.bf16.msra.mxu0 0
    %376 = vmatprep.subr.bf16.mxu0 0
    %377 = vmatpush1.bf16.msra.mxu0 0
    %378 = vmatprep.subr.bf16.mxu0 0
    %379 = vmatpush1.bf16.msra.mxu0 0
    %380 = vmatprep.subr.bf16.mxu0 0
    %381 = vmatpush1.bf16.msra.mxu0 0
    %382 = vmatprep.mubr.bf16.mxu0 0
    %383 = vmatmul.mubr.bf16.gmra.mrb[0].mxu0 %v348
    %v384 = vpop.f32.mrb[0].mxu0
    %v385 = vadd.f32 0.0, %v384
    %v386 = vpop.f32.mrb[0].mxu0
    %v387 = vpop.f32.mrb[0].mxu0
    %v388 = vadd.f32 0.0, %v387
    %v389 = vpop.f32.mrb[0].mxu0
    %390 = vdwg.mxu0
    %v391 = vpack.c.bf16 %v388, %v385
    %v392 = vshrl.u32 %v246, 16
    %v393 = vpack.i.b16 %v392, %v392
    %v395 = vlaneseq
    %v396 = vshrl.u32 %v395, 7
    %v397 = vsub.s32 1, %v396
    %v398 = vrot.slane %v393, %v397
    %v399 = vadd.bf16 %v391, %v398
    %s400 = scalar_lea.vmem [#allocation5], 256
    %v401 = vld [vmem:[%s400] sm:$0xf]
    %v402 = vld [vmem:[%s400 + $0x4] sm:$0xf]
    %v403 = vld [vmem:[%s2] sm:$0x4]
    %v406 = vunpack.c.l.b16 %v401
    %v407 = vunpack.c.l.b16 %v402
    %v408 = vpack.c.b16 %v407, %v406
    %vm410 = vcmask 130048
    %v412 = vsel %vm410, %v399, 0
    %414 = vmatprep.subr.bf16.mxu0 0
    %415 = vmatpush1.bf16.msra.mxu0 %v408
    %416 = vmatprep.subr.bf16.mxu0 0
    %417 = vmatpush1.bf16.msra.mxu0 0
    %418 = vmatprep.subr.bf16.mxu0 0
    %419 = vmatpush1.bf16.msra.mxu0 0
    %420 = vmatprep.subr.bf16.mxu0 0
    %421 = vmatpush1.bf16.msra.mxu0 0
    %422 = vmatprep.subr.bf16.mxu0 0
    %423 = vmatpush1.bf16.msra.mxu0 0
    %424 = vmatprep.subr.bf16.mxu0 0
    %425 = vmatpush1.bf16.msra.mxu0 0
    %426 = vmatprep.subr.bf16.mxu0 0
    %427 = vmatpush1.bf16.msra.mxu0 0
    %428 = vmatprep.subr.bf16.mxu0 0
    %429 = vmatpush1.bf16.msra.mxu0 0
    %430 = vmatprep.subr.bf16.mxu0 0
    %431 = vmatpush1.bf16.msra.mxu0 0
    %432 = vmatprep.subr.bf16.mxu0 0
    %433 = vmatpush1.bf16.msra.mxu0 0
    %434 = vmatprep.subr.bf16.mxu0 0
    %435 = vmatpush1.bf16.msra.mxu0 0
    %436 = vmatprep.subr.bf16.mxu0 0
    %437 = vmatpush1.bf16.msra.mxu0 0
    %438 = vmatprep.subr.bf16.mxu0 0
    %439 = vmatpush1.bf16.msra.mxu0 0
    %440 = vmatprep.subr.bf16.mxu0 0
    %441 = vmatpush1.bf16.msra.mxu0 0
    %442 = vmatprep.subr.bf16.mxu0 0
    %443 = vmatpush1.bf16.msra.mxu0 0
    %444 = vmatprep.subr.bf16.mxu0 0
    %445 = vmatpush1.bf16.msra.mxu0 0
    %446 = vmatprep.mubr.bf16.mxu0 0
    %447 = vmatmul.mubr.bf16.gmra.mrb[0].mxu0 %v412
    %v448 = vpop.f32.mrb[0].mxu0
    %v449 = vadd.f32 0.0, %v448
    %v450 = vpop.f32.mrb[0].mxu0
    %v451 = vpop.f32.mrb[0].mxu0
    %v452 = vadd.f32 0.0, %v451
    %v453 = vpop.f32.mrb[0].mxu0
    %454 = vdwg.mxu0
    %v455 = vpack.c.bf16 %v452, %v449
    %v457 = vpack.i.b16 %v403, %v403
    %v459 = vlaneseq
    %v460 = vshrl.u32 %v459, 7
    %v461 = vsub.s32 2, %v460
    %v462 = vrot.slane %v457, %v461
    %v463 = vadd.bf16 %v455, %v462
    %v464 = vmax.bf16 %v463, 0
    %s465 = scalar_lea.vmem [#allocation5], 320
    %v466 = vld [vmem:[%s465] sm:$0xf]
    %v467 = vld [vmem:[%s465 + $0x4] sm:$0xf]
    %v468 = vld [vmem:[%s465 + $0x8] sm:$0xf]
    %v469 = vld [vmem:[%s465 + $0xc] sm:$0xf]
    %v470 = vld [vmem:[%s465 + $0x10] sm:$0xf]
    %v471 = vld [vmem:[%s465 + $0x14] sm:$0xf]
    %v472 = vld [vmem:[%s465 + $0x18] sm:$0xf]
    %v473 = vld [vmem:[%s465 + $0x1c] sm:$0xf]
    %v482 = vunpack.c.l.b16 %v466
    %v483 = vunpack.c.l.b16 %v467
    %v484 = vunpack.c.l.b16 %v468
    %v485 = vunpack.c.l.b16 %v469
    %v486 = vunpack.c.l.b16 %v470
    %v487 = vunpack.c.l.b16 %v471
    %v488 = vunpack.c.l.b16 %v472
    %v489 = vunpack.c.l.b16 %v473
    %v490 = vpack.c.b16 %v483, %v482
    %v491 = vpack.c.b16 %v485, %v484
    %v492 = vpack.c.b16 %v487, %v486
    %v493 = vpack.c.b16 %v489, %v488
    %v499 = vsel %vm346, %v464, 0
    %501 = vmatprep.subr.bf16.mxu0 0
    %502 = vmatpush1.bf16.msra.mxu0 %v490
    %503 = vmatprep.subr.bf16.mxu0 0
    %504 = vmatpush1.bf16.msra.mxu0 %v491
    %505 = vmatprep.subr.bf16.mxu0 0
    %506 = vmatpush1.bf16.msra.mxu0 %v492
    %507 = vmatprep.subr.bf16.mxu0 0
    %508 = vmatpush1.bf16.msra.mxu0 %v493
    %509 = vmatprep.subr.bf16.mxu0 0
    %510 = vmatpush1.bf16.msra.mxu0 0
    %511 = vmatprep.subr.bf16.mxu0 0
    %512 = vmatpush1.bf16.msra.mxu0 0
    %513 = vmatprep.subr.bf16.mxu0 0
    %514 = vmatpush1.bf16.msra.mxu0 0
    %515 = vmatprep.subr.bf16.mxu0 0
    %516 = vmatpush1.bf16.msra.mxu0 0
    %517 = vmatprep.subr.bf16.mxu0 0
    %518 = vmatpush1.bf16.msra.mxu0 0
    %519 = vmatprep.subr.bf16.mxu0 0
    %520 = vmatpush1.bf16.msra.mxu0 0
    %521 = vmatprep.subr.bf16.mxu0 0
    %522 = vmatpush1.bf16.msra.mxu0 0
    %523 = vmatprep.subr.bf16.mxu0 0
    %524 = vmatpush1.bf16.msra.mxu0 0
    %525 = vmatprep.subr.bf16.mxu0 0
    %526 = vmatpush1.bf16.msra.mxu0 0
    %527 = vmatprep.subr.bf16.mxu0 0
    %528 = vmatpush1.bf16.msra.mxu0 0
    %529 = vmatprep.subr.bf16.mxu0 0
    %530 = vmatpush1.bf16.msra.mxu0 0
    %531 = vmatprep.subr.bf16.mxu0 0
    %532 = vmatpush1.bf16.msra.mxu0 0
    %533 = vmatprep.mubr.bf16.mxu0 0
    %534 = vmatmul.mubr.bf16.gmra.mrb[0].mxu0 %v499
    %v535 = vpop.f32.mrb[0].mxu0
    %v536 = vadd.f32 0.0, %v535
    %v537 = vpop.f32.mrb[0].mxu0
    %v538 = vpop.f32.mrb[0].mxu0
    %v539 = vadd.f32 0.0, %v538
    %v540 = vpop.f32.mrb[0].mxu0
    %541 = vdwg.mxu0
    %v542 = vpack.c.bf16 %v539, %v536
    %v543 = vshrl.u32 %v403, 16
    %v544 = vpack.i.b16 %v543, %v543
    %v546 = vlaneseq
    %v547 = vshrl.u32 %v546, 7
    %v548 = vsub.s32 2, %v547
    %v549 = vrot.slane %v544, %v548
    %v550 = vadd.bf16 %v542, %v549
    %v551 = vmax.bf16 %v550, 0
    %s552 = scalar_lea.vmem [#allocation5], 384
    %v553 = vld [vmem:[%s552] sm:$0xf]
    %v554 = vld [vmem:[%s552 + $0x4] sm:$0xf]
    %v555 = vld [vmem:[%s552 + $0x8] sm:$0xf]
    %v556 = vld [vmem:[%s552 + $0xc] sm:$0xf]
    %v557 = vld [vmem:[%s2] sm:$0x8]
    %v562 = vunpack.c.l.b16 %v553
    %v563 = vunpack.c.l.b16 %v554
    %v564 = vunpack.c.l.b16 %v555
    %v565 = vunpack.c.l.b16 %v556
    %v566 = vpack.c.b16 %v563, %v562
    %v567 = vpack.c.b16 %v565, %v564
    %v571 = vsel %vm186, %v551, 0
    %573 = vmatprep.subr.bf16.mxu0 0
    %574 = vmatpush1.bf16.msra.mxu0 %v566
    %575 = vmatprep.subr.bf16.mxu0 0
    %576 = vmatpush1.bf16.msra.mxu0 %v567
    %577 = vmatprep.subr.bf16.mxu0 0
    %578 = vmatpush1.bf16.msra.mxu0 0
    %579 = vmatprep.subr.bf16.mxu0 0
    %580 = vmatpush1.bf16.msra.mxu0 0
    %581 = vmatprep.subr.bf16.mxu0 0
    %582 = vmatpush1.bf16.msra.mxu0 0
    %583 = vmatprep.subr.bf16.mxu0 0
    %584 = vmatpush1.bf16.msra.mxu0 0
    %585 = vmatprep.subr.bf16.mxu0 0
    %586 = vmatpush1.bf16.msra.mxu0 0
    %587 = vmatprep.subr.bf16.mxu0 0
    %588 = vmatpush1.bf16.msra.mxu0 0
    %589 = vmatprep.subr.bf16.mxu0 0
    %590 = vmatpush1.bf16.msra.mxu0 0
    %591 = vmatprep.subr.bf16.mxu0 0
    %592 = vmatpush1.bf16.msra.mxu0 0
    %593 = vmatprep.subr.bf16.mxu0 0
    %594 = vmatpush1.bf16.msra.mxu0 0
    %595 = vmatprep.subr.bf16.mxu0 0
    %596 = vmatpush1.bf16.msra.mxu0 0
    %597 = vmatprep.subr.bf16.mxu0 0
    %598 = vmatpush1.bf16.msra.mxu0 0
    %599 = vmatprep.subr.bf16.mxu0 0
    %600 = vmatpush1.bf16.msra.mxu0 0
    %601 = vmatprep.subr.bf16.mxu0 0
    %602 = vmatpush1.bf16.msra.mxu0 0
    %603 = vmatprep.subr.bf16.mxu0 0
    %604 = vmatpush1.bf16.msra.mxu0 0
    %605 = vmatprep.mubr.bf16.mxu0 0
    %606 = vmatmul.mubr.bf16.gmra.mrb[0].mxu0 %v571
    %v607 = vpop.f32.mrb[0].mxu0
    %v608 = vadd.f32 0.0, %v607
    %v609 = vpop.f32.mrb[0].mxu0
    %v610 = vpop.f32.mrb[0].mxu0
    %v611 = vadd.f32 0.0, %v610
    %v612 = vpop.f32.mrb[0].mxu0
    %613 = vdwg.mxu0
    %v614 = vpack.c.bf16 %v611, %v608
    %v616 = vpack.i.b16 %v557, %v557
    %v618 = vlaneseq
    %v619 = vshrl.u32 %v618, 7
    %v620 = vsub.s32 3, %v619
    %v621 = vrot.slane %v616, %v620
    %v622 = vadd.bf16 %v614, %v621
    %v623 = vmax.bf16 %v622, 0
    %s624 = scalar_lea.vmem [#allocation5], 448
    %v625 = vld [vmem:[%s624] sm:$0xf]
    %v626 = vld [vmem:[%s624 + $0x4] sm:$0xf]
    %v627 = vld [vmem:[%s624 + $0x8] sm:$0xf]
    %v628 = vld [vmem:[%s624 + $0xc] sm:$0xf]
    %v633 = vunpack.c.l.b16 %v625
    %v634 = vunpack.c.l.b16 %v626
    %v635 = vunpack.c.l.b16 %v627
    %v636 = vunpack.c.l.b16 %v628
    %v637 = vpack.c.b16 %v634, %v633
    %v638 = vpack.c.b16 %v636, %v635
    %v642 = vsel %vm186, %v623, 0
    %644 = vmatprep.subr.bf16.mxu0 0
    %645 = vmatpush1.bf16.msra.mxu0 %v637
    %646 = vmatprep.subr.bf16.mxu0 0
    %647 = vmatpush1.bf16.msra.mxu0 %v638
    %648 = vmatprep.subr.bf16.mxu0 0
    %649 = vmatpush1.bf16.msra.mxu0 0
    %650 = vmatprep.subr.bf16.mxu0 0
    %651 = vmatpush1.bf16.msra.mxu0 0
    %652 = vmatprep.subr.bf16.mxu0 0
    %653 = vmatpush1.bf16.msra.mxu0 0
    %654 = vmatprep.subr.bf16.mxu0 0
    %655 = vmatpush1.bf16.msra.mxu0 0
    %656 = vmatprep.subr.bf16.mxu0 0
    %657 = vmatpush1.bf16.msra.mxu0 0
    %658 = vmatprep.subr.bf16.mxu0 0
    %659 = vmatpush1.bf16.msra.mxu0 0
    %660 = vmatprep.subr.bf16.mxu0 0
    %661 = vmatpush1.bf16.msra.mxu0 0
    %662 = vmatprep.subr.bf16.mxu0 0
    %663 = vmatpush1.bf16.msra.mxu0 0
    %664 = vmatprep.subr.bf16.mxu0 0
    %665 = vmatpush1.bf16.msra.mxu0 0
    %666 = vmatprep.subr.bf16.mxu0 0
    %667 = vmatpush1.bf16.msra.mxu0 0
    %668 = vmatprep.subr.bf16.mxu0 0
    %669 = vmatpush1.bf16.msra.mxu0 0
    %670 = vmatprep.subr.bf16.mxu0 0
    %671 = vmatpush1.bf16.msra.mxu0 0
    %672 = vmatprep.subr.bf16.mxu0 0
    %673 = vmatpush1.bf16.msra.mxu0 0
    %674 = vmatprep.subr.bf16.mxu0 0
    %675 = vmatpush1.bf16.msra.mxu0 0
    %676 = vmatprep.mubr.bf16.mxu0 0
    %677 = vmatmul.mubr.bf16.gmra.mrb[0].mxu0 %v642
    %v678 = vpop.f32.mrb[0].mxu0
    %v679 = vadd.f32 0.0, %v678
    %v680 = vpop.f32.mrb[0].mxu0
    %v681 = vpop.f32.mrb[0].mxu0
    %v682 = vadd.f32 0.0, %v681
    %v683 = vpop.f32.mrb[0].mxu0
    %684 = vdwg.mxu0
    %v685 = vpack.c.bf16 %v682, %v679
    %v686 = vshrl.u32 %v557, 16
    %v687 = vpack.i.b16 %v686, %v686
    %v689 = vlaneseq
    %v690 = vshrl.u32 %v689, 7
    %v691 = vsub.s32 3, %v690
    %v692 = vrot.slane %v687, %v691
    %v693 = vadd.bf16 %v685, %v692
    %v694 = vxor.u32 %v693, 2147516416
    %v696 = vmul.bf16 %v694, 1069105081
    %v697 = vpow.bf16.pop %v696
    %v698 = vadd.bf16 %v697, 1065369472
    %v699 = vrcp.bf16.pop %v698
    %v700 = vmul.bf16 1065369472, %v699
    %v701 = vunpack.c.l.bf16 %v700
    %v702 = vunpack.c.h.bf16 %v700
    %703 = vst [vmem:[#allocation7] sm:$0xff] %v701
    %704 = vst [vmem:[#allocation7 + $0x8] sm:$0xff] %v702
    // Predicated region
    $region22: #{tpu_custom_call.1} parent=1 // pred_check
      _
    $region23: #{tpu_custom_call.1} parent=1 // pred_check_branch
      %706 = sbr.rel (0) target = $region25
    $region24: #{tpu_custom_call.1} parent=1 // pred_region
      %s708 = ssub.s32 256, 256
      %709 = vsyncadd [#allocation4], %s708
      %s710 = sshll.u32 [#allocation7], 4
      %s711 = int_to_ptr.vmem [resolvable:$true] %s710
      %716 = dma.vmem_to_hbm [thread:$0]  %s711, 256, %s3, [#allocation4], 128, 128, 8
    $region25: #{tpu_custom_call.1} parent=1 // pred_fallthru
      _
    // Predicated region
    $region26: #{tpu_custom_call.1} parent=1 // pred_check
      _
    $region27: #{tpu_custom_call.1} parent=1 // pred_check_branch
      %718 = sbr.rel (0) target = $region29
    $region28: #{tpu_custom_call.1} parent=1 // pred_region
      %719 = dma.done [#allocation4], 256
    $region29: #{tpu_custom_call.1} parent=1 // pred_fallthru
      _
    %720 = vsyncpa [#allocation3], 1
    %721 = vsyncpa [#allocation6], 1
    %722 = vsyncpa [#allocation4], 1

</llo_original>
